<compile_context>
chip_gen: v7x
topology: tpu7x:2x2x1
jax: 0.10.0
libtpu: 0.0.40
codegen_flags: <defaults>
</compile_context>

<pallas_src>
import numpy as np
import jax
import jax.numpy as jnp
from jax.experimental import pallas as pl
from jax.experimental.pallas import tpu as pltpu


def gnn_encoder_kernel(cols_ref, valid_ref,                 # scalar prefetch (SMEM)
                       a_ref, xk_ref, xr_ref, invdeg_ref,
                       wl_ref, bl_ref, wr_ref,
                       wf_ref, bf_ref,
                       wp_ref, bp_ref,
                       out_ref, acc_ref):
    i = pl.program_id(0)
    k = pl.program_id(1)

    @pl.when(k == 0)
    def _init():
        acc_ref[...] = jnp.zeros_like(acc_ref)

    # Accumulate only real (non-padding) adjacency blocks: acc += A[i, col] @ X[col]
    @pl.when(valid_ref[i, k] == 1)
    def _accum():
        acc_ref[...] += jnp.dot(a_ref[...], xk_ref[...],
                                preferred_element_type=jnp.float32)

    @pl.when(k == pl.num_programs(1) - 1)
    def _finish():
        # Mean aggregation: fp32 per-row 1/deg scale; agg stays fp32.
        agg = acc_ref[...] * invdeg_ref[...]                       # (tile_n, F_in) fp32
        # SAGEConv: agg @ W_l + b_l + x_i @ W_r  (two dots, no concatenated copy)
        h = jnp.dot(agg, wl_ref[...], preferred_element_type=jnp.float32)
        h = h + jnp.dot(xr_ref[...], wr_ref[...],
                        preferred_element_type=jnp.float32)
        h = h + bl_ref[...]
        h = jnp.maximum(h, 0.0)                                    # relu; dropout p=0 -> id
        # ffw_lins[0]
        h = jnp.dot(h.astype(wf_ref.dtype), wf_ref[...],
                    preferred_element_type=jnp.float32) + bf_ref[...]
        h = jnp.maximum(h, 0.0)
        # proj (output columns padded to a lane-dense 128-wide slab)
        out = jnp.dot(h.astype(wp_ref.dtype), wp_ref[...],
                      preferred_element_type=jnp.float32) + bp_ref[...]
        out_ref[...] = out.astype(out_ref.dtype)


def gnn_encoder_forward(x, edge_index, params, *, tile_n=256, tile_k=2048,
                        compute_dtype=jnp.bfloat16):
    """x: [N, F_in] float32, edge_index: [2, E] int32 (row0=src, row1=tgt).

    Note: not meant to be wrapped in jit (the block-sparse structure is built
    host-side from the concrete edge list).
    """
    N, F_in = x.shape
    H = params["w_l"].shape[1]
    O = params["w_p"].shape[1]

    # --- tile selection ------------------------------------------------------
    tile_n = min(tile_n, N)
    tile_k = min(tile_k, N)
    # Keep grid axis 0 >= 2 when possible so v7x's two TensorCores both get rows.
    if N // tile_n < 2 and N % 2 == 0 and (N // 2) % 8 == 0:
        tile_n = N // 2
    assert N % tile_n == 0 and N % tile_k == 0
    nb_i, nb_k = N // tile_n, N // tile_k

    O_pad = ((O + 127) // 128) * 128        # lane-dense output slab

    # --- graph preprocessing -------------------------------------------------
    # Unnormalized 0/1 adjacency built once in the compute dtype (single scatter pass);
    # degree computed from the edge list (O(E)), 1/deg kept per-row in fp32.
    src = np.asarray(edge_index[0])
    tgt = np.asarray(edge_index[1])
    A = jnp.zeros((N, N), compute_dtype).at[tgt, src].add(1.0)
    deg = jnp.zeros((N,), jnp.float32).at[tgt].add(1.0)
    inv_deg = (1.0 / jnp.maximum(deg, 1.0)).reshape(N, 1)

    # Block-sparse structure: for each row-block, the column-blocks containing >=1 edge.
    # Scalar-prefetched; padding entries repeat the last valid block (revisit -> no new
    # DMA) and are masked out in the kernel, so only non-empty A blocks are streamed.
    # TODO(synk): for graphs too large to materialize N^2 in HBM at all, replace this with
    # a CSR edge-list row gather (manual make_async_copy) so HBM traffic is O(E*F_in);
    # per-generation adjacency compression (i8/i4 on v5e/v6e, fp8 on v7x) also left out
    # to keep a single portable bf16 MXU path.
    blk_has = np.zeros((nb_i, nb_k), dtype=bool)
    blk_has[tgt // tile_n, src // tile_k] = True
    k_max = max(1, int(blk_has.sum(axis=1).max()))
    blk_cols = np.zeros((nb_i, k_max), np.int32)
    blk_valid = np.zeros((nb_i, k_max), np.int32)
    for bi in range(nb_i):
        cols = np.nonzero(blk_has[bi])[0]
        n = cols.size
        blk_cols[bi, :n] = cols
        blk_valid[bi, :n] = 1
        if n:
            blk_cols[bi, n:] = cols[-1]
    blk_cols = jnp.asarray(blk_cols)
    blk_valid = jnp.asarray(blk_valid)

    # --- operands --------------------------------------------------------------
    x_c = x.astype(compute_dtype)
    w_l = params["w_l"].astype(jnp.float32)          # fp32: preserves fp32 agg precision
    w_r = params["w_r"].astype(compute_dtype)
    w_f = params["w_f"].astype(compute_dtype)
    w_p = jnp.zeros((H, O_pad), jnp.float32).at[:, :O].set(params["w_p"]).astype(compute_dtype)
    b_l = params["b_l"].astype(jnp.float32)
    b_f = params["b_f"].astype(jnp.float32)
    b_p = jnp.zeros((1, O_pad), jnp.float32).at[:, :O].set(params["b_p"])

    grid = (nb_i, k_max)

    # --- VMEM budget (generation-aware: v7x has 64 MiB physical, v5e/v6e 128 MiB) -----
    cb = jnp.dtype(compute_dtype).itemsize
    est = 2 * (tile_n * tile_k * cb + tile_k * F_in * cb
               + tile_n * F_in * cb + tile_n * 4)                           # pipelined inputs
    est += 2 * (F_in * H * 4 + F_in * H * cb + H * H * cb + H * O_pad * cb)  # weights
    est += 2 * (H * 4 + H * 4 + O_pad * 4)                                   # biases
    est += 2 * tile_n * O_pad * cb                                           # output block
    est += tile_n * F_in * 4                                                 # fp32 accumulator
    try:
        vmem_cap = int(pltpu.get_tpu_info().vmem_capacity_bytes)
    except Exception:
        vmem_cap = 64 << 20                                                  # conservative
    vmem_limit = int(min(max(4 * est, 16 << 20), vmem_cap // 2))
    vmem_limit = max(vmem_limit, 2 * est)

    out = pl.pallas_call(
        gnn_encoder_kernel,
        out_shape=jax.ShapeDtypeStruct((N, O_pad), compute_dtype),
        grid_spec=pltpu.PrefetchScalarGridSpec(
            num_scalar_prefetch=2,
            grid=grid,
            in_specs=[
                pl.BlockSpec((tile_n, tile_k), lambda i, k, c, v: (i, c[i, k])),  # A block
                pl.BlockSpec((tile_k, F_in), lambda i, k, c, v: (c[i, k], 0)),    # X source rows
                pl.BlockSpec((tile_n, F_in), lambda i, k, c, v: (i, 0)),          # X root rows
                pl.BlockSpec((tile_n, 1), lambda i, k, c, v: (i, 0)),             # 1/deg (fp32)
                pl.BlockSpec((F_in, H), lambda i, k, c, v: (0, 0)),               # W_l (fp32)
                pl.BlockSpec((1, H), lambda i, k, c, v: (0, 0)),                  # b_l
                pl.BlockSpec((F_in, H), lambda i, k, c, v: (0, 0)),               # W_r
                pl.BlockSpec((H, H), lambda i, k, c, v: (0, 0)),                  # W_f
                pl.BlockSpec((1, H), lambda i, k, c, v: (0, 0)),                  # b_f
                pl.BlockSpec((H, O_pad), lambda i, k, c, v: (0, 0)),              # W_p (padded)
                pl.BlockSpec((1, O_pad), lambda i, k, c, v: (0, 0)),              # b_p (padded)
            ],
            out_specs=pl.BlockSpec((tile_n, O_pad), lambda i, k, c, v: (i, 0)),
            scratch_shapes=[pltpu.VMEM((tile_n, F_in), jnp.float32)],
        ),
        compiler_params=pltpu.CompilerParams(
            dimension_semantics=("parallel", "arbitrary"),
            vmem_limit_bytes=vmem_limit),
    )(blk_cols, blk_valid, A, x_c, x_c, inv_deg,
      w_l, b_l, w_r, w_f, b_f, w_p, b_p)

    return out[:, :O].astype(jnp.float32)


def reference_forward_fp32(x, edge_index, params):
    N = x.shape[0]
    src, tgt = edge_index[0], edge_index[1]
    A = jnp.zeros((N, N), jnp.float32).at[tgt, src].add(1.0)
    deg = A.sum(axis=1, keepdims=True)
    A_norm = A / jnp.maximum(deg, 1.0)
    agg = A_norm @ x
    h = jnp.maximum(agg @ params["w_l"] + params["b_l"] + x @ params["w_r"], 0.0)
    h = jnp.maximum(h @ params["w_f"] + params["b_f"], 0.0)
    return h @ params["w_p"] + params["b_p"]


def reference_forward_matched(x, edge_index, params, compute_dtype=jnp.bfloat16):
    """Mirrors the kernel's bf16-operand / fp32-accumulate / fp32-agg math."""
    N = x.shape[0]
    src, tgt = edge_index[0], edge_index[1]
    A = jnp.zeros((N, N), compute_dtype).at[tgt, src].add(1.0)
    deg = jnp.zeros((N,), jnp.float32).at[tgt].add(1.0)
    inv_deg = (1.0 / jnp.maximum(deg, 1.0)).reshape(N, 1)
    x_c = x.astype(compute_dtype)
    agg = jnp.dot(A, x_c, preferred_element_type=jnp.float32) * inv_deg
    h = jnp.dot(agg, params["w_l"].astype(jnp.float32), preferred_element_type=jnp.float32)
    h = h + jnp.dot(x_c, params["w_r"].astype(compute_dtype),
                    preferred_element_type=jnp.float32)
    h = jnp.maximum(h + params["b_l"], 0.0)
    h = jnp.dot(h.astype(compute_dtype), params["w_f"].astype(compute_dtype),
                preferred_element_type=jnp.float32) + params["b_f"]
    h = jnp.maximum(h, 0.0)
    return jnp.dot(h.astype(compute_dtype), params["w_p"].astype(compute_dtype),
                   preferred_element_type=jnp.float32) + params["b_p"]


if __name__ == "__main__":
    # Small deterministic config: 64 nodes, 16 input features, hidden=32, out=8, 256 edges.
    N, F_IN, HIDDEN, OUT_C, E = 64, 16, 32, 8, 256

    key = jax.random.PRNGKey(0)
    k_x, k_src, k_tgt, k_wl, k_bl, k_wr, k_wf, k_bf, k_wp, k_bp = jax.random.split(key, 10)

    x = jax.random.normal(k_x, (N, F_IN), jnp.float32)
    edge_index = jnp.stack([
        jax.random.randint(k_src, (E,), 0, N, jnp.int32),
        jax.random.randint(k_tgt, (E,), 0, N, jnp.int32),
    ], axis=0)

    def init_w(k, shape, fan_in):
        return (jax.random.normal(k, shape, jnp.float32) / jnp.sqrt(fan_in)).astype(jnp.float32)

    params = {
        # SAGEConv: lin_l (aggregated neighbors, has bias), lin_r (root, no bias)
        "w_l": init_w(k_wl, (F_IN, HIDDEN), F_IN),
        "b_l": init_w(k_bl, (1, HIDDEN), F_IN),
        "w_r": init_w(k_wr, (F_IN, HIDDEN), F_IN),
        # ffw_lins[0]
        "w_f": init_w(k_wf, (HIDDEN, HIDDEN), HIDDEN),
        "b_f": init_w(k_bf, (1, HIDDEN), HIDDEN),
        # proj
        "w_p": init_w(k_wp, (HIDDEN, OUT_C), HIDDEN),
        "b_p": init_w(k_bp, (1, OUT_C), HIDDEN),
    }

    out = gnn_encoder_forward(x, edge_index, params)
    out = jax.block_until_ready(out)

    ref_matched = reference_forward_matched(x, edge_index, params)
    ref_fp32 = reference_forward_fp32(x, edge_index, params)

    assert out.shape == (N, OUT_C)
    # Tight check vs. a reference using the same bf16-operand / fp32-accumulate math
    # (kernel output is additionally rounded to bf16 once).
    assert jnp.allclose(out, ref_matched, atol=3e-2, rtol=3e-2), "mismatch vs matched reference"
    # Loose check vs. the pure-fp32 reference (bf16 operand quantization only).
    assert jnp.allclose(out, ref_fp32, atol=1e-1, rtol=1e-1), "mismatch vs fp32 reference"

    # TODO(synk): unused submodules of the torch forward (input_conv, lins, batch_norms,
    # ffw_batch_norms, out_conv) are intentionally not instantiated; dropout p=0.0 is identity.
    print("KERNEL_OK")
</pallas_src>

<mosaic_0001>
module attributes {stable_mosaic.version = 11 : i64} {
  func.func @gnn_encoder_kernel(%arg0: i32, %arg1: i32, %arg2: memref<2x1xi32, #tpu.memory_space<smem>>, %arg3: memref<2x1xi32, #tpu.memory_space<smem>>, %arg4: memref<32x64xbf16, #tpu.memory_space<vmem>>, %arg5: memref<64x16xbf16, #tpu.memory_space<vmem>>, %arg6: memref<32x16xbf16, #tpu.memory_space<vmem>>, %arg7: memref<32x1xf32, #tpu.memory_space<vmem>>, %arg8: memref<16x32xf32, #tpu.memory_space<vmem>>, %arg9: memref<1x32xf32, #tpu.memory_space<vmem>>, %arg10: memref<16x32xbf16, #tpu.memory_space<vmem>>, %arg11: memref<32x32xbf16, #tpu.memory_space<vmem>>, %arg12: memref<1x32xf32, #tpu.memory_space<vmem>>, %arg13: memref<32x128xbf16, #tpu.memory_space<vmem>>, %arg14: memref<1x128xf32, #tpu.memory_space<vmem>>, %arg15: memref<32x128xbf16, #tpu.memory_space<vmem>>, %arg16: memref<32x16xf32, #tpu.memory_space<vmem>>) attributes {dimension_semantics = [#tpu.dimension_semantics<parallel>, #tpu.dimension_semantics<arbitrary>], iteration_bounds = array<i64: 2, 1>, scalar_prefetch = 2 : i64, scratch_operands = 1 : i64, tpu.core_type = #tpu.core_type<tc>, window_params = [{transform_indices = @transform_0, window_bounds = array<i64: 32, 64>}, {transform_indices = @transform_1, window_bounds = array<i64: 64, 16>}, {transform_indices = @transform_2, window_bounds = array<i64: 32, 16>}, {transform_indices = @transform_3, window_bounds = array<i64: 32, 1>}, {pipeline_mode = #tpu.pipeline_mode<synchronous>, transform_indices = @transform_4, window_bounds = array<i64: 16, 32>}, {pipeline_mode = #tpu.pipeline_mode<synchronous>, transform_indices = @transform_5, window_bounds = array<i64: 1, 32>}, {pipeline_mode = #tpu.pipeline_mode<synchronous>, transform_indices = @transform_6, window_bounds = array<i64: 16, 32>}, {pipeline_mode = #tpu.pipeline_mode<synchronous>, transform_indices = @transform_7, window_bounds = array<i64: 32, 32>}, {pipeline_mode = #tpu.pipeline_mode<synchronous>, transform_indices = @transform_8, window_bounds = array<i64: 1, 32>}, {pipeline_mode = #tpu.pipeline_mode<synchronous>, transform_indices = @transform_9, window_bounds = array<i64: 32, 128>}, {pipeline_mode = #tpu.pipeline_mode<synchronous>, transform_indices = @transform_10, window_bounds = array<i64: 1, 128>}, {transform_indices = @transform_11, window_bounds = array<i64: 32, 128>}]} {
    %c0_i32 = arith.constant 0 : i32
    %0 = arith.cmpi eq, %arg1, %c0_i32 : i32
    %1 = arith.extui %0 : i1 to i32
    %c0_i32_0 = arith.constant 0 : i32
    %2 = arith.cmpi ne, %1, %c0_i32_0 : i32
    scf.if %2 {
      %cst = arith.constant 0.000000e+00 : f32
      %12 = vector.broadcast %cst : f32 to vector<32x16xf32>
      %c0 = arith.constant 0 : index
      %c0_4 = arith.constant 0 : index
      %13 = vector.load %arg16[%c0, %c0_4] : memref<32x16xf32, #tpu.memory_space<vmem>>, vector<32x16xf32>
      tpu.vector_store %arg16[%c0, %c0_4], %12 {strides = array<i32>} : memref<32x16xf32, #tpu.memory_space<vmem>>, vector<32x16xf32>,
    } else {
    }
    %3 = arith.index_cast %arg0 : i32 to index
    %4 = arith.index_cast %arg1 : i32 to index
    %5 = memref.load %arg3[%3, %4] : memref<2x1xi32, #tpu.memory_space<smem>>
    %c1_i32 = arith.constant 1 : i32
    %6 = arith.cmpi eq, %5, %c1_i32 : i32
    %7 = arith.extui %6 : i1 to i32
    %c0_i32_1 = arith.constant 0 : i32
    %8 = arith.cmpi ne, %7, %c0_i32_1 : i32
    scf.if %8 {
      %c0 = arith.constant 0 : index
      %c0_4 = arith.constant 0 : index
      %12 = vector.load %arg16[%c0, %c0_4] : memref<32x16xf32, #tpu.memory_space<vmem>>, vector<32x16xf32>
      %c0_5 = arith.constant 0 : index
      %c0_6 = arith.constant 0 : index
      %13 = vector.load %arg4[%c0_5, %c0_6] : memref<32x64xbf16, #tpu.memory_space<vmem>>, vector<32x64xbf16>
      %c0_7 = arith.constant 0 : index
      %c0_8 = arith.constant 0 : index
      %14 = vector.load %arg5[%c0_7, %c0_8] : memref<64x16xbf16, #tpu.memory_space<vmem>>, vector<64x16xbf16>
      %cst = arith.constant dense<0.000000e+00> : vector<32x16xf32>
      %15 = tpu.matmul %13, %14, %cst {dimension_numbers = #tpu.dot_dimension_numbers<[1], [0], [0], [1], [0, 0, 1, 1], [], []>} : vector<32x64xbf16>, vector<64x16xbf16>, vector<32x16xf32> -> vector<32x16xf32>
      %16 = arith.addf %12, %15 : vector<32x16xf32>
      %c0_9 = arith.constant 0 : index
      %c0_10 = arith.constant 0 : index
      %17 = vector.load %arg16[%c0_9, %c0_10] : memref<32x16xf32, #tpu.memory_space<vmem>>, vector<32x16xf32>
      tpu.vector_store %arg16[%c0_9, %c0_10], %16 {strides = array<i32>} : memref<32x16xf32, #tpu.memory_space<vmem>>, vector<32x16xf32>,
    } else {
    }
    %c0_i32_2 = arith.constant 0 : i32
    %9 = arith.cmpi eq, %arg1, %c0_i32_2 : i32
    %10 = arith.extui %9 : i1 to i32
    %c0_i32_3 = arith.constant 0 : i32
    %11 = arith.cmpi ne, %10, %c0_i32_3 : i32
    scf.if %11 {
      %c0 = arith.constant 0 : index
      %c0_4 = arith.constant 0 : index
      %12 = vector.load %arg16[%c0, %c0_4] : memref<32x16xf32, #tpu.memory_space<vmem>>, vector<32x16xf32>
      %c0_5 = arith.constant 0 : index
      %c0_6 = arith.constant 0 : index
      %13 = vector.load %arg7[%c0_5, %c0_6] : memref<32x1xf32, #tpu.memory_space<vmem>>, vector<32x1xf32>
      %14 = vector.broadcast %13 : vector<32x1xf32> to vector<32x16xf32>
      %15 = arith.mulf %12, %14 : vector<32x16xf32>
      %c0_7 = arith.constant 0 : index
      %c0_8 = arith.constant 0 : index
      %16 = vector.load %arg8[%c0_7, %c0_8] : memref<16x32xf32, #tpu.memory_space<vmem>>, vector<16x32xf32>
      %cst = arith.constant dense<0.000000e+00> : vector<32x32xf32>
      %17 = tpu.matmul %15, %16, %cst {dimension_numbers = #tpu.dot_dimension_numbers<[1], [0], [0], [1], [0, 0, 1, 1], [], []>} : vector<32x16xf32>, vector<16x32xf32>, vector<32x32xf32> -> vector<32x32xf32>
      %c0_9 = arith.constant 0 : index
      %c0_10 = arith.constant 0 : index
      %18 = vector.load %arg6[%c0_9, %c0_10] : memref<32x16xbf16, #tpu.memory_space<vmem>>, vector<32x16xbf16>
      %c0_11 = arith.constant 0 : index
      %c0_12 = arith.constant 0 : index
      %19 = vector.load %arg10[%c0_11, %c0_12] : memref<16x32xbf16, #tpu.memory_space<vmem>>, vector<16x32xbf16>
      %cst_13 = arith.constant dense<0.000000e+00> : vector<32x32xf32>
      %20 = tpu.matmul %18, %19, %cst_13 {dimension_numbers = #tpu.dot_dimension_numbers<[1], [0], [0], [1], [0, 0, 1, 1], [], []>} : vector<32x16xbf16>, vector<16x32xbf16>, vector<32x32xf32> -> vector<32x32xf32>
      %21 = arith.addf %17, %20 : vector<32x32xf32>
      %c0_14 = arith.constant 0 : index
      %c0_15 = arith.constant 0 : index
      %22 = vector.load %arg9[%c0_14, %c0_15] : memref<1x32xf32, #tpu.memory_space<vmem>>, vector<1x32xf32>
      %23 = vector.broadcast %22 : vector<1x32xf32> to vector<32x32xf32>
      %24 = arith.addf %21, %23 : vector<32x32xf32>
      %cst_16 = arith.constant 0.000000e+00 : f32
      %25 = vector.broadcast %cst_16 : f32 to vector<32x32xf32>
      %26 = arith.maximumf %24, %25 : vector<32x32xf32>
      %27 = arith.truncf %26 : vector<32x32xf32> to vector<32x32xbf16>
      %c0_17 = arith.constant 0 : index
      %c0_18 = arith.constant 0 : index
      %28 = vector.load %arg11[%c0_17, %c0_18] : memref<32x32xbf16, #tpu.memory_space<vmem>>, vector<32x32xbf16>
      %cst_19 = arith.constant dense<0.000000e+00> : vector<32x32xf32>
      %29 = tpu.matmul %27, %28, %cst_19 {dimension_numbers = #tpu.dot_dimension_numbers<[1], [0], [0], [1], [0, 0, 1, 1], [], []>} : vector<32x32xbf16>, vector<32x32xbf16>, vector<32x32xf32> -> vector<32x32xf32>
      %c0_20 = arith.constant 0 : index
      %c0_21 = arith.constant 0 : index
      %30 = vector.load %arg12[%c0_20, %c0_21] : memref<1x32xf32, #tpu.memory_space<vmem>>, vector<1x32xf32>
      %31 = vector.broadcast %30 : vector<1x32xf32> to vector<32x32xf32>
      %32 = arith.addf %29, %31 : vector<32x32xf32>
      %cst_22 = arith.constant 0.000000e+00 : f32
      %33 = vector.broadcast %cst_22 : f32 to vector<32x32xf32>
      %34 = arith.maximumf %32, %33 : vector<32x32xf32>
      %35 = arith.truncf %34 : vector<32x32xf32> to vector<32x32xbf16>
      %c0_23 = arith.constant 0 : index
      %c0_24 = arith.constant 0 : index
      %36 = vector.load %arg13[%c0_23, %c0_24] : memref<32x128xbf16, #tpu.memory_space<vmem>>, vector<32x128xbf16>
      %cst_25 = arith.constant dense<0.000000e+00> : vector<32x128xf32>
      %37 = tpu.matmul %35, %36, %cst_25 {dimension_numbers = #tpu.dot_dimension_numbers<[1], [0], [0], [1], [0, 0, 1, 1], [], []>} : vector<32x32xbf16>, vector<32x128xbf16>, vector<32x128xf32> -> vector<32x128xf32>
      %c0_26 = arith.constant 0 : index
      %c0_27 = arith.constant 0 : index
      %38 = vector.load %arg14[%c0_26, %c0_27] : memref<1x128xf32, #tpu.memory_space<vmem>>, vector<1x128xf32>
      %39 = vector.broadcast %38 : vector<1x128xf32> to vector<32x128xf32>
      %40 = arith.addf %37, %39 : vector<32x128xf32>
      %41 = arith.truncf %40 : vector<32x128xf32> to vector<32x128xbf16>
      %c0_28 = arith.constant 0 : index
      %c0_29 = arith.constant 0 : index
      %42 = vector.load %arg15[%c0_28, %c0_29] : memref<32x128xbf16, #tpu.memory_space<vmem>>, vector<32x128xbf16>
      tpu.vector_store %arg15[%c0_28, %c0_29], %41 {strides = array<i32>} : memref<32x128xbf16, #tpu.memory_space<vmem>>, vector<32x128xbf16>,
    } else {
    }
    return
  }
  func.func @transform_0(%arg0: i32, %arg1: i32, %arg2: memref<2x1xi32, #tpu.memory_space<smem>>, %arg3: memref<2x1xi32, #tpu.memory_space<smem>>) -> (i32, i32) {
    %0 = arith.index_cast %arg0 : i32 to index
    %1 = arith.index_cast %arg1 : i32 to index
    %2 = memref.load %arg2[%0, %1] : memref<2x1xi32, #tpu.memory_space<smem>>
    %c0_i32 = arith.constant 0 : i32
    return %arg0, %2 : i32, i32
  }
  func.func @transform_1(%arg0: i32, %arg1: i32, %arg2: memref<2x1xi32, #tpu.memory_space<smem>>, %arg3: memref<2x1xi32, #tpu.memory_space<smem>>) -> (i32, i32) {
    %0 = arith.index_cast %arg0 : i32 to index
    %1 = arith.index_cast %arg1 : i32 to index
    %2 = memref.load %arg2[%0, %1] : memref<2x1xi32, #tpu.memory_space<smem>>
    %c0_i32 = arith.constant 0 : i32
    %c0_i32_0 = arith.constant 0 : i32
    return %2, %c0_i32 : i32, i32
  }
  func.func @transform_2(%arg0: i32, %arg1: i32, %arg2: memref<2x1xi32, #tpu.memory_space<smem>>, %arg3: memref<2x1xi32, #tpu.memory_space<smem>>) -> (i32, i32) {
    %c0_i32 = arith.constant 0 : i32
    %c0_i32_0 = arith.constant 0 : i32
    return %arg0, %c0_i32 : i32, i32
  }
  func.func @transform_3(%arg0: i32, %arg1: i32, %arg2: memref<2x1xi32, #tpu.memory_space<smem>>, %arg3: memref<2x1xi32, #tpu.memory_space<smem>>) -> (i32, i32) {
    %c0_i32 = arith.constant 0 : i32
    %c0_i32_0 = arith.constant 0 : i32
    return %arg0, %c0_i32 : i32, i32
  }
  func.func @transform_4(%arg0: i32, %arg1: i32, %arg2: memref<2x1xi32, #tpu.memory_space<smem>>, %arg3: memref<2x1xi32, #tpu.memory_space<smem>>) -> (i32, i32) {
    %c0_i32 = arith.constant 0 : i32
    %c0_i32_0 = arith.constant 0 : i32
    %c0_i32_1 = arith.constant 0 : i32
    return %c0_i32, %c0_i32_0 : i32, i32
  }
  func.func @transform_5(%arg0: i32, %arg1: i32, %arg2: memref<2x1xi32, #tpu.memory_space<smem>>, %arg3: memref<2x1xi32, #tpu.memory_space<smem>>) -> (i32, i32) {
    %c0_i32 = arith.constant 0 : i32
    %c0_i32_0 = arith.constant 0 : i32
    %c0_i32_1 = arith.constant 0 : i32
    return %c0_i32, %c0_i32_0 : i32, i32
  }
  func.func @transform_6(%arg0: i32, %arg1: i32, %arg2: memref<2x1xi32, #tpu.memory_space<smem>>, %arg3: memref<2x1xi32, #tpu.memory_space<smem>>) -> (i32, i32) {
    %c0_i32 = arith.constant 0 : i32
    %c0_i32_0 = arith.constant 0 : i32
    %c0_i32_1 = arith.constant 0 : i32
    return %c0_i32, %c0_i32_0 : i32, i32
  }
  func.func @transform_7(%arg0: i32, %arg1: i32, %arg2: memref<2x1xi32, #tpu.memory_space<smem>>, %arg3: memref<2x1xi32, #tpu.memory_space<smem>>) -> (i32, i32) {
    %c0_i32 = arith.constant 0 : i32
    %c0_i32_0 = arith.constant 0 : i32
    %c0_i32_1 = arith.constant 0 : i32
    return %c0_i32, %c0_i32_0 : i32, i32
  }
  func.func @transform_8(%arg0: i32, %arg1: i32, %arg2: memref<2x1xi32, #tpu.memory_space<smem>>, %arg3: memref<2x1xi32, #tpu.memory_space<smem>>) -> (i32, i32) {
    %c0_i32 = arith.constant 0 : i32
    %c0_i32_0 = arith.constant 0 : i32
    %c0_i32_1 = arith.constant 0 : i32
    return %c0_i32, %c0_i32_0 : i32, i32
  }
  func.func @transform_9(%arg0: i32, %arg1: i32, %arg2: memref<2x1xi32, #tpu.memory_space<smem>>, %arg3: memref<2x1xi32, #tpu.memory_space<smem>>) -> (i32, i32) {
    %c0_i32 = arith.constant 0 : i32
    %c0_i32_0 = arith.constant 0 : i32
    %c0_i32_1 = arith.constant 0 : i32
    return %c0_i32, %c0_i32_0 : i32, i32
  }
  func.func @transform_10(%arg0: i32, %arg1: i32, %arg2: memref<2x1xi32, #tpu.memory_space<smem>>, %arg3: memref<2x1xi32, #tpu.memory_space<smem>>) -> (i32, i32) {
    %c0_i32 = arith.constant 0 : i32
    %c0_i32_0 = arith.constant 0 : i32
    %c0_i32_1 = arith.constant 0 : i32
    return %c0_i32, %c0_i32_0 : i32, i32
  }
  func.func @transform_11(%arg0: i32, %arg1: i32, %arg2: memref<2x1xi32, #tpu.memory_space<smem>>, %arg3: memref<2x1xi32, #tpu.memory_space<smem>>) -> (i32, i32) {
    %c0_i32 = arith.constant 0 : i32
    %c0_i32_0 = arith.constant 0 : i32
    return %arg0, %c0_i32 : i32, i32
  }
}

</mosaic_0001>

<llo_original>
// kernel: tpu_custom_call.1
$region0: #{tpu_custom_call.1}
  #allocation0 [shape = 'u32[]', space=smem, size = 0x4, offset = 0x4, fixed_abs, tag = 'smem constant byte address 0x4 - core index']
  #allocation1 [shape = 'u32[144,128]{1,0:T(1,128)}', space=vmem, size = 0x12000, scoped, tag = 'internal scratch']
  #allocation2 [shape = 'f32[32,16]{1,0:T(8,128)}', space=vmem, size = 0x4000, scoped, tag = 'scratch operand']
  #allocation3 [shape = 's32[1]{0}', space=sflag, size = 0x4, scoped, tag = 'scoped memory for tpu_custom_call.1']
  #allocation4 [shape = 'u8[1024]{0}', space=smem, size = 0x400, scoped, tag = 'prefetched SMEM operand 0']
  #allocation5 [shape = 'u8[1024]{0}', space=smem, size = 0x400, scoped, tag = 'prefetched SMEM operand 1']
  %s0 = inlined_call_operand.vmem [shape: s32[2,1], index: 0, kind: input, shape index: {}]
  %s1 = inlined_call_operand.vmem [shape: s32[2,1], index: 1, kind: input, shape index: {}]
  %s2 = inlined_call_operand.vmem [shape: bf16[64,64], index: 2, kind: input, shape index: {}]
  %s3 = inlined_call_operand.vmem [shape: bf16[64,16], index: 3, kind: input, shape index: {}]
  %s4 = inlined_call_operand.vmem [shape: bf16[64,16], index: 4, kind: input, shape index: {}]
  %s5 = inlined_call_operand.vmem [shape: f32[64,1], index: 5, kind: input, shape index: {}]
  %s6 = inlined_call_operand.vmem [shape: f32[16,32], index: 6, kind: input, shape index: {}]
  %s7 = inlined_call_operand.vmem [shape: f32[1,32], index: 7, kind: input, shape index: {}]
  %s8 = inlined_call_operand.vmem [shape: bf16[16,32], index: 8, kind: input, shape index: {}]
  %s9 = inlined_call_operand.vmem [shape: bf16[32,32], index: 9, kind: input, shape index: {}]
  %s10 = inlined_call_operand.vmem [shape: f32[1,32], index: 10, kind: input, shape index: {}]
  %s11 = inlined_call_operand.vmem [shape: bf16[32,128], index: 11, kind: input, shape index: {}]
  %s12 = inlined_call_operand.vmem [shape: f32[1,128], index: 12, kind: input, shape index: {}]
  %s13 = inlined_call_operand.hbm [shape: bf16[64,128], index: 13, kind: output, shape index: {}]
  %s14 = sld [smem:[#allocation0]]
  $region89: #{tpu_custom_call.1} parent=0
    _
  %s16 = ssub.s32 1, %s14
  %s17 = scalar_select 0, %s16, %s14
  %s18 = sshll.u32 %s0, 4
  %s19 = int_to_ptr.vmem [resolvable:$true] %s18
  %21 = dma.vmem_to_smem %s19, 32, [#allocation4], [#allocation3]
  %s22 = sshll.u32 %s1, 4
  %s23 = int_to_ptr.vmem [resolvable:$true] %s22
  %25 = dma.vmem_to_smem %s23, 32, [#allocation5], [#allocation3]
  %26 = dma.done [#allocation3], 64
  %27 = sfence
  $region1: #{tpu_custom_call.1} parent=0
    #allocation6 [shape = 'u8[16384]{0}', space=vmem, size = 0x4000, scoped, tag = 'output window, operand 0']
    #allocation7 [shape = 's32[2]{0}', space=sflag, size = 0x8, scoped, tag = 'scoped memory for tpu_custom_call.1']
    %28 = vsyncpa [#allocation7], 0
    %s29 = scalar_lea.sflag [#allocation7], 1
    %30 = vsyncpa %s29, 0
    loop: start=0, step=1, limit=4
    $region2: #{tpu_custom_call.1} parent=1 // loop_pre_header
      _
    $region3: #{tpu_custom_call.1} parent=1 // loop_header
      %s32 = sphi 0, %s36
      %p33 = scmp.ge.s32.totalorder %s32, 4
      %s39 = sphi 0, %s51
      %s40 = sphi 0, %s47
      %s41 = sphi 0, %s39
      %s42 = sphi 0, %s40
      %s43 = sphi 0, %s41
      %s44 = sphi 0, %s42
      %s72 = sphi 0, %s74
      %s75 = sphi 0, %s72
      %s76 = sphi 0, %s75
      %s92 = sphi 0, %s76
      %s114 = sphi 0, %s116
      %s117 = sphi 0, %s114
      %s118 = sphi 0, %s117
      %s134 = sphi 0, %s118
      %s140 = sphi 0, %s142
      %s143 = sphi 0, %s140
      %s144 = sphi 0, %s143
      %s160 = sphi 0, %s144
      %s166 = sphi 0, %s168
      %s169 = sphi 0, %s166
      %s170 = sphi 0, %s169
      %s186 = sphi 0, %s170
      %s190 = sphi 0, %s190
      %s192 = sphi 0, %s190
      %s193 = sphi 0, %s192
      %s207 = sphi 0, %s193
      %s211 = sphi 0, %s211
      %s213 = sphi 0, %s211
      %s214 = sphi 0, %s213
      %s228 = sphi 0, %s214
      %s232 = sphi 0, %s232
      %s234 = sphi 0, %s232
      %s235 = sphi 0, %s234
      %s249 = sphi 0, %s235
      %s253 = sphi 0, %s253
      %s255 = sphi 0, %s253
      %s256 = sphi 0, %s255
      %s270 = sphi 0, %s256
      %s274 = sphi 0, %s274
      %s276 = sphi 0, %s274
      %s277 = sphi 0, %s276
      %s291 = sphi 0, %s277
      %s295 = sphi 0, %s295
      %s297 = sphi 0, %s295
      %s298 = sphi 0, %s297
      %s312 = sphi 0, %s298
      %s316 = sphi 0, %s316
      %s318 = sphi 0, %s316
      %s319 = sphi 0, %s318
      %s333 = sphi 0, %s319
      %s339 = sphi 0, %s341
      %s342 = sphi 0, %s339
      %s343 = sphi 0, %s342
      %s359 = sphi 0, %s343
    $region4: #{tpu_custom_call.1} parent=1 // loop_header_branch
      %35 = sbr.rel (%p33) target = $region8
    $region5: #{tpu_custom_call.1} parent=1 // loop_body
      %s37 = ssub.s32 %s32, 1
      %s38 = ssub.s32 %s32, 2
      %s45 = sadd.s32 1, %s40
      %p46 = scmp.ge.s32.totalorder %s45, 1
      %s47 = scalar_select %p46, 0, %s45
      %s48 = sadd.s32 1, %s39
      %s49 = scalar_select %p46, %s48, %s39
      %p50 = scmp.ge.s32.totalorder %s49, 2
      %s51 = scalar_select %p50, 0, %s49
      %s52 = sshra.s32 %s40, 7
      %s53 = sand.u32 %s40, 127
      %s54 = sadd.s32 %s52, %s39
      %s55 = smul.u32 %s54, 128
      %s56 = sshra.s32 %s40, 7
      %s57 = sand.u32 %s40, 127
      %s58 = sadd.s32 %s55, %s57
      %s59 = sld [smem:[#allocation4 + %s58]]
      %s60 = sshra.s32 %s47, 7
      %s61 = sand.u32 %s47, 127
      %s62 = sadd.s32 %s60, %s51
      %s63 = smul.u32 %s62, 128
      %s64 = sshra.s32 %s47, 7
      %s65 = sand.u32 %s47, 127
      %s66 = sadd.s32 %s63, %s65
      %s67 = sld [smem:[#allocation4 + %s66]]
      %s68 = ssub.s32 %s39, %s51
      %s69 = ssub.s32 %s59, %s67
      %s70 = sor.u32 %s68, %s69
      %p71 = scmp.eq.s32.totalorder %s70, 0
      %s73 = sadd.s32 %s72, 1
      %s74 = scalar_select %p71, %s72, %s73
      %p77 = pneg %p71
      %p78 = scmp.eq.s32.totalorder %s32, 1
      %p79 = por %p77, %p78
      %p80 = scmp.ne.s32.totalorder %s72, %s75
      %p81 = scmp.eq.s32.totalorder %s32, 0
      %p82 = por %p80, %p81
      %p83 = scmp.ne.s32.totalorder %s72, %s75
      %p84 = scmp.eq.s32.totalorder %s37, 1
      %p85 = por %p83, %p84
      %p86 = scmp.ne.s32.totalorder %s75, %s76
      %p87 = scmp.eq.s32.totalorder %s37, 0
      %p88 = por %p86, %p87
      %p89 = scmp.ne.s32.totalorder %s75, %s76
      %p90 = scmp.eq.s32.totalorder %s38, 1
      %p91 = por %p89, %p90
      %p93 = scmp.ne.s32.totalorder %s76, %s92
      %p94 = scmp.eq.s32.totalorder %s38, 0
      %p95 = por %p93, %p94
      %s96 = sshra.s32 %s40, 7
      %s97 = sand.u32 %s40, 127
      %s98 = sadd.s32 %s96, %s39
      %s99 = smul.u32 %s98, 128
      %s100 = sshra.s32 %s40, 7
      %s101 = sand.u32 %s40, 127
      %s102 = sadd.s32 %s99, %s101
      %s103 = sld [smem:[#allocation4 + %s102]]
      %s104 = sshra.s32 %s47, 7
      %s105 = sand.u32 %s47, 127
      %s106 = sadd.s32 %s104, %s51
      %s107 = smul.u32 %s106, 128
      %s108 = sshra.s32 %s47, 7
      %s109 = sand.u32 %s47, 127
      %s110 = sadd.s32 %s107, %s109
      %s111 = sld [smem:[#allocation4 + %s110]]
      %s112 = ssub.s32 %s103, %s111
      %p113 = scmp.eq.s32.totalorder %s112, 0
      %s115 = sadd.s32 %s114, 1
      %s116 = scalar_select %p113, %s114, %s115
      %p119 = pneg %p113
      %p120 = scmp.eq.s32.totalorder %s32, 1
      %p121 = por %p119, %p120
      %p122 = scmp.ne.s32.totalorder %s114, %s117
      %p123 = scmp.eq.s32.totalorder %s32, 0
      %p124 = por %p122, %p123
      %p125 = scmp.ne.s32.totalorder %s114, %s117
      %p126 = scmp.eq.s32.totalorder %s37, 1
      %p127 = por %p125, %p126
      %p128 = scmp.ne.s32.totalorder %s117, %s118
      %p129 = scmp.eq.s32.totalorder %s37, 0
      %p130 = por %p128, %p129
      %p131 = scmp.ne.s32.totalorder %s117, %s118
      %p132 = scmp.eq.s32.totalorder %s38, 1
      %p133 = por %p131, %p132
      %p135 = scmp.ne.s32.totalorder %s118, %s134
      %p136 = scmp.eq.s32.totalorder %s38, 0
      %p137 = por %p135, %p136
      %s138 = ssub.s32 %s39, %s51
      %p139 = scmp.eq.s32.totalorder %s138, 0
      %s141 = sadd.s32 %s140, 1
      %s142 = scalar_select %p139, %s140, %s141
      %p145 = pneg %p139
      %p146 = scmp.eq.s32.totalorder %s32, 1
      %p147 = por %p145, %p146
      %p148 = scmp.ne.s32.totalorder %s140, %s143
      %p149 = scmp.eq.s32.totalorder %s32, 0
      %p150 = por %p148, %p149
      %p151 = scmp.ne.s32.totalorder %s140, %s143
      %p152 = scmp.eq.s32.totalorder %s37, 1
      %p153 = por %p151, %p152
      %p154 = scmp.ne.s32.totalorder %s143, %s144
      %p155 = scmp.eq.s32.totalorder %s37, 0
      %p156 = por %p154, %p155
      %p157 = scmp.ne.s32.totalorder %s143, %s144
      %p158 = scmp.eq.s32.totalorder %s38, 1
      %p159 = por %p157, %p158
      %p161 = scmp.ne.s32.totalorder %s144, %s160
      %p162 = scmp.eq.s32.totalorder %s38, 0
      %p163 = por %p161, %p162
      %s164 = ssub.s32 %s39, %s51
      %p165 = scmp.eq.s32.totalorder %s164, 0
      %s167 = sadd.s32 %s166, 1
      %s168 = scalar_select %p165, %s166, %s167
      %p171 = pneg %p165
      %p172 = scmp.eq.s32.totalorder %s32, 1
      %p173 = por %p171, %p172
      %p174 = scmp.ne.s32.totalorder %s166, %s169
      %p175 = scmp.eq.s32.totalorder %s32, 0
      %p176 = por %p174, %p175
      %p177 = scmp.ne.s32.totalorder %s166, %s169
      %p178 = scmp.eq.s32.totalorder %s37, 1
      %p179 = por %p177, %p178
      %p180 = scmp.ne.s32.totalorder %s169, %s170
      %p181 = scmp.eq.s32.totalorder %s37, 0
      %p182 = por %p180, %p181
      %p183 = scmp.ne.s32.totalorder %s169, %s170
      %p184 = scmp.eq.s32.totalorder %s38, 1
      %p185 = por %p183, %p184
      %p187 = scmp.ne.s32.totalorder %s170, %s186
      %p188 = scmp.eq.s32.totalorder %s38, 0
      %p189 = por %p187, %p188
      %s191 = sadd.s32 %s190, 1
      %p194 = scmp.eq.s32.totalorder %s32, 1
      %p195 = scmp.ne.s32.totalorder %s190, %s192
      %p196 = scmp.eq.s32.totalorder %s32, 0
      %p197 = por %p195, %p196
      %p198 = scmp.ne.s32.totalorder %s190, %s192
      %p199 = scmp.eq.s32.totalorder %s37, 1
      %p200 = por %p198, %p199
      %p201 = scmp.ne.s32.totalorder %s192, %s193
      %p202 = scmp.eq.s32.totalorder %s37, 0
      %p203 = por %p201, %p202
      %p204 = scmp.ne.s32.totalorder %s192, %s193
      %p205 = scmp.eq.s32.totalorder %s38, 1
      %p206 = por %p204, %p205
      %p208 = scmp.ne.s32.totalorder %s193, %s207
      %p209 = scmp.eq.s32.totalorder %s38, 0
      %p210 = por %p208, %p209
      %s212 = sadd.s32 %s211, 1
      %p215 = scmp.eq.s32.totalorder %s32, 1
      %p216 = scmp.ne.s32.totalorder %s211, %s213
      %p217 = scmp.eq.s32.totalorder %s32, 0
      %p218 = por %p216, %p217
      %p219 = scmp.ne.s32.totalorder %s211, %s213
      %p220 = scmp.eq.s32.totalorder %s37, 1
      %p221 = por %p219, %p220
      %p222 = scmp.ne.s32.totalorder %s213, %s214
      %p223 = scmp.eq.s32.totalorder %s37, 0
      %p224 = por %p222, %p223
      %p225 = scmp.ne.s32.totalorder %s213, %s214
      %p226 = scmp.eq.s32.totalorder %s38, 1
      %p227 = por %p225, %p226
      %p229 = scmp.ne.s32.totalorder %s214, %s228
      %p230 = scmp.eq.s32.totalorder %s38, 0
      %p231 = por %p229, %p230
      %s233 = sadd.s32 %s232, 1
      %p236 = scmp.eq.s32.totalorder %s32, 1
      %p237 = scmp.ne.s32.totalorder %s232, %s234
      %p238 = scmp.eq.s32.totalorder %s32, 0
      %p239 = por %p237, %p238
      %p240 = scmp.ne.s32.totalorder %s232, %s234
      %p241 = scmp.eq.s32.totalorder %s37, 1
      %p242 = por %p240, %p241
      %p243 = scmp.ne.s32.totalorder %s234, %s235
      %p244 = scmp.eq.s32.totalorder %s37, 0
      %p245 = por %p243, %p244
      %p246 = scmp.ne.s32.totalorder %s234, %s235
      %p247 = scmp.eq.s32.totalorder %s38, 1
      %p248 = por %p246, %p247
      %p250 = scmp.ne.s32.totalorder %s235, %s249
      %p251 = scmp.eq.s32.totalorder %s38, 0
      %p252 = por %p250, %p251
      %s254 = sadd.s32 %s253, 1
      %p257 = scmp.eq.s32.totalorder %s32, 1
      %p258 = scmp.ne.s32.totalorder %s253, %s255
      %p259 = scmp.eq.s32.totalorder %s32, 0
      %p260 = por %p258, %p259
      %p261 = scmp.ne.s32.totalorder %s253, %s255
      %p262 = scmp.eq.s32.totalorder %s37, 1
      %p263 = por %p261, %p262
      %p264 = scmp.ne.s32.totalorder %s255, %s256
      %p265 = scmp.eq.s32.totalorder %s37, 0
      %p266 = por %p264, %p265
      %p267 = scmp.ne.s32.totalorder %s255, %s256
      %p268 = scmp.eq.s32.totalorder %s38, 1
      %p269 = por %p267, %p268
      %p271 = scmp.ne.s32.totalorder %s256, %s270
      %p272 = scmp.eq.s32.totalorder %s38, 0
      %p273 = por %p271, %p272
      %s275 = sadd.s32 %s274, 1
      %p278 = scmp.eq.s32.totalorder %s32, 1
      %p279 = scmp.ne.s32.totalorder %s274, %s276
      %p280 = scmp.eq.s32.totalorder %s32, 0
      %p281 = por %p279, %p280
      %p282 = scmp.ne.s32.totalorder %s274, %s276
      %p283 = scmp.eq.s32.totalorder %s37, 1
      %p284 = por %p282, %p283
      %p285 = scmp.ne.s32.totalorder %s276, %s277
      %p286 = scmp.eq.s32.totalorder %s37, 0
      %p287 = por %p285, %p286
      %p288 = scmp.ne.s32.totalorder %s276, %s277
      %p289 = scmp.eq.s32.totalorder %s38, 1
      %p290 = por %p288, %p289
      %p292 = scmp.ne.s32.totalorder %s277, %s291
      %p293 = scmp.eq.s32.totalorder %s38, 0
      %p294 = por %p292, %p293
      %s296 = sadd.s32 %s295, 1
      %p299 = scmp.eq.s32.totalorder %s32, 1
      %p300 = scmp.ne.s32.totalorder %s295, %s297
      %p301 = scmp.eq.s32.totalorder %s32, 0
      %p302 = por %p300, %p301
      %p303 = scmp.ne.s32.totalorder %s295, %s297
      %p304 = scmp.eq.s32.totalorder %s37, 1
      %p305 = por %p303, %p304
      %p306 = scmp.ne.s32.totalorder %s297, %s298
      %p307 = scmp.eq.s32.totalorder %s37, 0
      %p308 = por %p306, %p307
      %p309 = scmp.ne.s32.totalorder %s297, %s298
      %p310 = scmp.eq.s32.totalorder %s38, 1
      %p311 = por %p309, %p310
      %p313 = scmp.ne.s32.totalorder %s298, %s312
      %p314 = scmp.eq.s32.totalorder %s38, 0
      %p315 = por %p313, %p314
      %s317 = sadd.s32 %s316, 1
      %p320 = scmp.eq.s32.totalorder %s32, 1
      %p321 = scmp.ne.s32.totalorder %s316, %s318
      %p322 = scmp.eq.s32.totalorder %s32, 0
      %p323 = por %p321, %p322
      %p324 = scmp.ne.s32.totalorder %s316, %s318
      %p325 = scmp.eq.s32.totalorder %s37, 1
      %p326 = por %p324, %p325
      %p327 = scmp.ne.s32.totalorder %s318, %s319
      %p328 = scmp.eq.s32.totalorder %s37, 0
      %p329 = por %p327, %p328
      %p330 = scmp.ne.s32.totalorder %s318, %s319
      %p331 = scmp.eq.s32.totalorder %s38, 1
      %p332 = por %p330, %p331
      %p334 = scmp.ne.s32.totalorder %s319, %s333
      %p335 = scmp.eq.s32.totalorder %s38, 0
      %p336 = por %p334, %p335
      %s337 = ssub.s32 %s39, %s51
      %p338 = scmp.eq.s32.totalorder %s337, 0
      %s340 = sadd.s32 %s339, 1
      %s341 = scalar_select %p338, %s339, %s340
      %p344 = pneg %p338
      %p345 = scmp.eq.s32.totalorder %s32, 1
      %p346 = por %p344, %p345
      %p347 = scmp.ne.s32.totalorder %s339, %s342
      %p348 = scmp.eq.s32.totalorder %s32, 0
      %p349 = por %p347, %p348
      %p350 = scmp.ne.s32.totalorder %s339, %s342
      %p351 = scmp.eq.s32.totalorder %s37, 1
      %p352 = por %p350, %p351
      %p353 = scmp.ne.s32.totalorder %s342, %s343
      %p354 = scmp.eq.s32.totalorder %s37, 0
      %p355 = por %p353, %p354
      %p356 = scmp.ne.s32.totalorder %s342, %s343
      %p357 = scmp.eq.s32.totalorder %s38, 1
      %p358 = por %p356, %p357
      %p360 = scmp.ne.s32.totalorder %s343, %s359
      %p361 = scmp.eq.s32.totalorder %s38, 0
      %p362 = por %p360, %p361
      %p363 = scmp.le.s32.totalorder 1, %s32
      %p364 = scmp.lt.s32.totalorder %s32, 3
      %p365 = pnand %p363, %p364
      %p366 = pneg %p365
      // Predicated region
      $region9: #{tpu_custom_call.1} parent=5 // pred_check
        _
      $region10: #{tpu_custom_call.1} parent=5 // pred_check_branch
        %368 = sbr.rel (%p365) target = $region12
      $region11: #{tpu_custom_call.1} parent=5 // pred_region
        %s369 = ssub.s32 %s32, 1
        // Predicated region
        $region13: #{tpu_custom_call.1} parent=11 // pred_check
          %p370 = pneg %p203
        $region14: #{tpu_custom_call.1} parent=11 // pred_check_branch
          %372 = sbr.rel (%p370) target = $region16
        $region15: #{tpu_custom_call.1} parent=11 // pred_region
          _
        $region16: #{tpu_custom_call.1} parent=11 // pred_fallthru
          _
        // Predicated region
        $region17: #{tpu_custom_call.1} parent=11 // pred_check
          %p373 = pneg %p224
        $region18: #{tpu_custom_call.1} parent=11 // pred_check_branch
          %375 = sbr.rel (%p373) target = $region20
        $region19: #{tpu_custom_call.1} parent=11 // pred_region
          _
        $region20: #{tpu_custom_call.1} parent=11 // pred_fallthru
          _
        // Predicated region
        $region21: #{tpu_custom_call.1} parent=11 // pred_check
          %p376 = pneg %p245
        $region22: #{tpu_custom_call.1} parent=11 // pred_check_branch
          %378 = sbr.rel (%p376) target = $region24
        $region23: #{tpu_custom_call.1} parent=11 // pred_region
          _
        $region24: #{tpu_custom_call.1} parent=11 // pred_fallthru
          _
        // Predicated region
        $region25: #{tpu_custom_call.1} parent=11 // pred_check
          %p379 = pneg %p266
        $region26: #{tpu_custom_call.1} parent=11 // pred_check_branch
          %381 = sbr.rel (%p379) target = $region28
        $region27: #{tpu_custom_call.1} parent=11 // pred_region
          _
        $region28: #{tpu_custom_call.1} parent=11 // pred_fallthru
          _
        // Predicated region
        $region29: #{tpu_custom_call.1} parent=11 // pred_check
          %p382 = pneg %p287
        $region30: #{tpu_custom_call.1} parent=11 // pred_check_branch
          %384 = sbr.rel (%p382) target = $region32
        $region31: #{tpu_custom_call.1} parent=11 // pred_region
          _
        $region32: #{tpu_custom_call.1} parent=11 // pred_fallthru
          _
        // Predicated region
        $region33: #{tpu_custom_call.1} parent=11 // pred_check
          %p385 = pneg %p308
        $region34: #{tpu_custom_call.1} parent=11 // pred_check_branch
          %387 = sbr.rel (%p385) target = $region36
        $region35: #{tpu_custom_call.1} parent=11 // pred_region
          _
        $region36: #{tpu_custom_call.1} parent=11 // pred_fallthru
          _
        // Predicated region
        $region37: #{tpu_custom_call.1} parent=11 // pred_check
          %p388 = pneg %p329
        $region38: #{tpu_custom_call.1} parent=11 // pred_check_branch
          %390 = sbr.rel (%p388) target = $region40
        $region39: #{tpu_custom_call.1} parent=11 // pred_region
          _
        $region40: #{tpu_custom_call.1} parent=11 // pred_fallthru
          _
      $region12: #{tpu_custom_call.1} parent=5 // pred_fallthru
        _
      %p391 = scmp.lt.s32.totalorder %s32, 2
      // Predicated region
      $region41: #{tpu_custom_call.1} parent=5 // pred_check
        %p392 = pneg %p391
      $region42: #{tpu_custom_call.1} parent=5 // pred_check_branch
        %394 = sbr.rel (%p392) target = $region44
      $region43: #{tpu_custom_call.1} parent=5 // pred_region
        // Predicated region
        $region45: #{tpu_custom_call.1} parent=43 // pred_check
          %p395 = pneg %p82
        $region46: #{tpu_custom_call.1} parent=43 // pred_check_branch
          %397 = sbr.rel (%p395) target = $region48
        $region47: #{tpu_custom_call.1} parent=43 // pred_region
          %s398 = sshra.s32 %s40, 7
          %s399 = sand.u32 %s40, 127
          %s400 = sadd.s32 %s398, %s39
          %s401 = smul.u32 %s400, 128
          %s402 = sshra.s32 %s40, 7
          %s403 = sand.u32 %s40, 127
          %s404 = sadd.s32 %s401, %s403
          %s405 = sld [smem:[#allocation4 + %s404]]
          %s406 = smul.u32 4, %s39
          %p407 = scmp.lt.s32.totalorder %s406, 7
          %s408 = scalar_select %p407, %s406, 7
          %p409 = scmp.lt.s32.totalorder %s405, 0
          %s410 = scalar_select %p409, %s405, 0
          %s411 = sadd.s32 %s410, %s408
          %s412 = smul.addr %s411, 4
          %s413 = scalar_lea.vmem %s2, %s412
          %s414 = sshra.s32 %s40, 7
          %s415 = sand.u32 %s40, 127
          %s416 = sadd.s32 %s414, %s39
          %s417 = smul.u32 %s416, 128
          %s418 = sshra.s32 %s40, 7
          %s419 = sand.u32 %s40, 127
          %s420 = sadd.s32 %s417, %s419
          %s421 = sld [smem:[#allocation4 + %s420]]
          %s422 = smul.u32 4, %s39
        $region48: #{tpu_custom_call.1} parent=43 // pred_fallthru
          _
        // Predicated region
        $region49: #{tpu_custom_call.1} parent=43 // pred_check
          %p423 = pneg %p124
        $region50: #{tpu_custom_call.1} parent=43 // pred_check_branch
          %425 = sbr.rel (%p423) target = $region52
        $region51: #{tpu_custom_call.1} parent=43 // pred_region
          %s426 = sshra.s32 %s40, 7
          %s427 = sand.u32 %s40, 127
          %s428 = sadd.s32 %s426, %s39
          %s429 = smul.u32 %s428, 128
          %s430 = sshra.s32 %s40, 7
          %s431 = sand.u32 %s40, 127
          %s432 = sadd.s32 %s429, %s431
          %s433 = sld [smem:[#allocation4 + %s432]]
          %s434 = smul.u32 8, %s433
          %p435 = scmp.lt.s32.totalorder %s434, 7
          %s436 = scalar_select %p435, %s434, 7
          %s437 = smul.addr %s436, 4
          %s438 = scalar_lea.vmem %s3, %s437
          %s439 = sshra.s32 %s40, 7
          %s440 = sand.u32 %s40, 127
          %s441 = sadd.s32 %s439, %s39
          %s442 = smul.u32 %s441, 128
          %s443 = sshra.s32 %s40, 7
          %s444 = sand.u32 %s40, 127
          %s445 = sadd.s32 %s442, %s444
          %s446 = sld [smem:[#allocation4 + %s445]]
          %s447 = smul.u32 8, %s446
        $region52: #{tpu_custom_call.1} parent=43 // pred_fallthru
          _
        // Predicated region
        $region53: #{tpu_custom_call.1} parent=43 // pred_check
          %p448 = pneg %p150
        $region54: #{tpu_custom_call.1} parent=43 // pred_check_branch
          %450 = sbr.rel (%p448) target = $region56
        $region55: #{tpu_custom_call.1} parent=43 // pred_region
          %s451 = smul.u32 4, %s39
          %p452 = scmp.lt.s32.totalorder %s451, 7
          %s453 = scalar_select %p452, %s451, 7
          %s454 = smul.addr %s453, 4
          %s455 = scalar_lea.vmem %s4, %s454
          %s456 = smul.u32 4, %s39
        $region56: #{tpu_custom_call.1} parent=43 // pred_fallthru
          _
        // Predicated region
        $region57: #{tpu_custom_call.1} parent=43 // pred_check
          %p457 = pneg %p176
        $region58: #{tpu_custom_call.1} parent=43 // pred_check_branch
          %459 = sbr.rel (%p457) target = $region60
        $region59: #{tpu_custom_call.1} parent=43 // pred_region
          %s460 = smul.u32 4, %s39
          %p461 = scmp.lt.s32.totalorder %s460, 7
          %s462 = scalar_select %p461, %s460, 7
          %s463 = smul.addr %s462, 8
          %s464 = scalar_lea.vmem %s5, %s463
          %s465 = smul.u32 4, %s39
        $region60: #{tpu_custom_call.1} parent=43 // pred_fallthru
          _
      $region44: #{tpu_custom_call.1} parent=5 // pred_fallthru
        _
      %p466 = scmp.le.s32.totalorder 1, %s32
      %p467 = scmp.lt.s32.totalorder %s32, 3
      %p468 = pnand %p466, %p467
      %p469 = pneg %p468
      // Predicated region
      $region61: #{tpu_custom_call.1} parent=5 // pred_check
        _
      $region62: #{tpu_custom_call.1} parent=5 // pred_check_branch
        %471 = sbr.rel (%p468) target = $region64
      $region63: #{tpu_custom_call.1} parent=5 // pred_region
        %s472 = ssub.s32 %s32, 1
        %s473 = sshra.s32 %s42, 7
        %s474 = sand.u32 %s42, 127
        %s475 = sadd.s32 %s473, %s41
        %s476 = smul.u32 %s475, 128
        %s477 = sshra.s32 %s42, 7
        %s478 = sand.u32 %s42, 127
        %s479 = sadd.s32 %s476, %s478
        %s480 = sld [smem:[#allocation4 + %s479]]
        %s481 = smul.u32 4, %s41
        %p482 = scmp.lt.s32.totalorder %s481, 7
        %s483 = scalar_select %p482, %s481, 7
        %p484 = scmp.lt.s32.totalorder %s480, 0
        %s485 = scalar_select %p484, %s480, 0
        %s486 = sadd.s32 %s485, %s483
        %s487 = smul.addr %s486, 4
        %s488 = scalar_lea.vmem %s2, %s487
        %p489 = pneg %p88
        %p490 = pneg %p85
        %s491 = sshra.s32 %s42, 7
        %s492 = sand.u32 %s42, 127
        %s493 = sadd.s32 %s491, %s41
        %s494 = smul.u32 %s493, 128
        %s495 = sshra.s32 %s42, 7
        %s496 = sand.u32 %s42, 127
        %s497 = sadd.s32 %s494, %s496
        %s498 = sld [smem:[#allocation4 + %s497]]
        %s499 = smul.u32 8, %s498
        %p500 = scmp.lt.s32.totalorder %s499, 7
        %s501 = scalar_select %p500, %s499, 7
        %s502 = smul.addr %s501, 4
        %s503 = scalar_lea.vmem %s3, %s502
        %p504 = pneg %p130
        %p505 = pneg %p127
        %s506 = smul.u32 4, %s41
        %p507 = scmp.lt.s32.totalorder %s506, 7
        %s508 = scalar_select %p507, %s506, 7
        %s509 = smul.addr %s508, 4
        %s510 = scalar_lea.vmem %s4, %s509
        %p511 = pneg %p156
        %p512 = pneg %p153
        %s513 = smul.u32 4, %s41
        %p514 = scmp.lt.s32.totalorder %s513, 7
        %s515 = scalar_select %p514, %s513, 7
        %s516 = smul.addr %s515, 8
        %s517 = scalar_lea.vmem %s5, %s516
        %p518 = pneg %p182
        %p519 = pneg %p179
        %p520 = pneg %p203
        %p521 = pneg %p200
        %p522 = pneg %p224
        %p523 = pneg %p221
        %p524 = pneg %p245
        %p525 = pneg %p242
        %p526 = pneg %p266
        %p527 = pneg %p263
        %p528 = pneg %p287
        %p529 = pneg %p284
        %p530 = pneg %p308
        %p531 = pneg %p305
        %p532 = pneg %p329
        %p533 = pneg %p326
        %p534 = pneg %p355
        %p535 = pneg %p352
        %s536 = sand.u32 %s342, 1
        %s537 = scalar_lea.sflag [#allocation7], %s536
        %s538 = sand.u32 %s342, 1
        %s539 = smul.addr %s538, 16
        %s540 = scalar_lea.vmem [#allocation6], %s539
        %s541 = sshra.s32 %s42, 7
        %s542 = sand.u32 %s42, 127
        %s543 = sadd.s32 %s541, %s41
        %s544 = smul.u32 %s543, 128
        %s545 = sshra.s32 %s42, 7
        %s546 = sand.u32 %s42, 127
        %s547 = sadd.s32 %s544, %s546
        %s548 = sld [smem:[#allocation4 + %s547]]
        %s549 = smul.u32 4, %s41
        %p550 = scmp.lt.s32.totalorder %s549, 7
        %s551 = scalar_select %p550, %s549, 7
        %p552 = scmp.lt.s32.totalorder %s548, 0
        %s553 = scalar_select %p552, %s548, 0
        %s554 = sadd.s32 %s553, %s551
        %s555 = smul.addr %s554, 4
        %s556 = scalar_lea.vmem %s2, %s555
        %s557 = sshra.s32 %s42, 7
        %s558 = sand.u32 %s42, 127
        %s559 = sadd.s32 %s557, %s41
        %s560 = smul.u32 %s559, 128
        %s561 = sshra.s32 %s42, 7
        %s562 = sand.u32 %s42, 127
        %s563 = sadd.s32 %s560, %s562
        %s564 = sld [smem:[#allocation4 + %s563]]
        %s565 = smul.u32 4, %s41
        %s566 = sshra.s32 %s42, 7
        %s567 = sand.u32 %s42, 127
        %s568 = sadd.s32 %s566, %s41
        %s569 = smul.u32 %s568, 128
        %s570 = sshra.s32 %s42, 7
        %s571 = sand.u32 %s42, 127
        %s572 = sadd.s32 %s569, %s571
        %s573 = sld [smem:[#allocation4 + %s572]]
        %s574 = smul.u32 8, %s573
        %p575 = scmp.lt.s32.totalorder %s574, 7
        %s576 = scalar_select %p575, %s574, 7
        %s577 = smul.addr %s576, 4
        %s578 = scalar_lea.vmem %s3, %s577
        %s579 = sshra.s32 %s42, 7
        %s580 = sand.u32 %s42, 127
        %s581 = sadd.s32 %s579, %s41
        %s582 = smul.u32 %s581, 128
        %s583 = sshra.s32 %s42, 7
        %s584 = sand.u32 %s42, 127
        %s585 = sadd.s32 %s582, %s584
        %s586 = sld [smem:[#allocation4 + %s585]]
        %s587 = smul.u32 8, %s586
        %s588 = smul.u32 4, %s41
        %p589 = scmp.lt.s32.totalorder %s588, 7
        %s590 = scalar_select %p589, %s588, 7
        %s591 = smul.addr %s590, 4
        %s592 = scalar_lea.vmem %s4, %s591
        %s593 = smul.u32 4, %s41
        %s594 = smul.u32 4, %s41
        %p595 = scmp.lt.s32.totalorder %s594, 7
        %s596 = scalar_select %p595, %s594, 7
        %s597 = smul.addr %s596, 8
        %s598 = scalar_lea.vmem %s5, %s597
        %s599 = smul.u32 4, %s41
        %s600 = smul.u32 4, %s41
        %p602 = scmp.eq.s32.totalorder %s42, 0
        // Predicated region
        $region65: #{tpu_custom_call.1} parent=63 // pred_check
          %p603 = pneg %p602
        $region66: #{tpu_custom_call.1} parent=63 // pred_check_branch
          %605 = sbr.rel (%p603) target = $region68
        $region67: #{tpu_custom_call.1} parent=63 // pred_region
          %vm606 = vcmask 130048
          %607 = vst.msk [vmem:[#allocation2] sm:$0xff] %vm606, 0.0
          %608 = vst.msk [vmem:[#allocation2 + $0x8] sm:$0xff] %vm606, 0.0
          %609 = vst.msk [vmem:[#allocation2 + $0x10] sm:$0xff] %vm606, 0.0
          %610 = vst.msk [vmem:[#allocation2 + $0x18] sm:$0xff] %vm606, 0.0
        $region68: #{tpu_custom_call.1} parent=63 // pred_fallthru
          _
        %s611 = sshra.s32 %s42, 7
        %s612 = sand.u32 %s42, 127
        %s613 = sadd.s32 %s611, %s41
        %s614 = smul.u32 %s613, 128
        %s615 = sshra.s32 %s42, 7
        %s616 = sand.u32 %s42, 127
        %s617 = sadd.s32 %s614, %s616
        %s618 = sld [smem:[#allocation5 + %s617]]
        %p619 = scmp.eq.s32.totalorder %s618, 1
        // Predicated region
        $region69: #{tpu_custom_call.1} parent=63 // pred_check
          %p620 = pneg %p619
        $region70: #{tpu_custom_call.1} parent=63 // pred_check_branch
          %622 = sbr.rel (%p620) target = $region72
        $region71: #{tpu_custom_call.1} parent=63 // pred_region
          %v623 = vld [vmem:[#allocation2] sm:$0xff]
          %v624 = vld [vmem:[#allocation2 + $0x8] sm:$0xff]
          %v625 = vld [vmem:[#allocation2 + $0x10] sm:$0xff]
          %v626 = vld [vmem:[#allocation2 + $0x18] sm:$0xff]
          %v627 = vld [vmem:[%s556] sm:$0xf]
          %v628 = vld [vmem:[%s556 + $0x4] sm:$0xf]
          %v629 = vld [vmem:[%s556 + $0x8] sm:$0xf]
          %v630 = vld [vmem:[%s556 + $0xc] sm:$0xf]
          %v631 = vld [vmem:[%s578] sm:$0xf]
          %v632 = vld [vmem:[%s578 + $0x4] sm:$0xf]
          %v633 = vld [vmem:[%s578 + $0x8] sm:$0xf]
          %v634 = vld [vmem:[%s578 + $0xc] sm:$0xf]
          %v635 = vld [vmem:[%s578 + $0x10] sm:$0xf]
          %v636 = vld [vmem:[%s578 + $0x14] sm:$0xf]
          %v637 = vld [vmem:[%s578 + $0x18] sm:$0xf]
          %v638 = vld [vmem:[%s578 + $0x1c] sm:$0xf]
          %v643 = vunpack.c.l.b16 %v627
          %v644 = vunpack.c.l.b16 %v628
          %v645 = vunpack.c.l.b16 %v629
          %v646 = vunpack.c.l.b16 %v630
          %v647 = vpack.c.b16 %v644, %v643
          %v648 = vpack.c.b16 %v646, %v645
          %v657 = vunpack.c.l.b16 %v631
          %v658 = vunpack.c.l.b16 %v632
          %v659 = vunpack.c.l.b16 %v633
          %v660 = vunpack.c.l.b16 %v634
          %v661 = vunpack.c.l.b16 %v635
          %v662 = vunpack.c.l.b16 %v636
          %v663 = vunpack.c.l.b16 %v637
          %v664 = vunpack.c.l.b16 %v638
          %v665 = vpack.c.b16 %v658, %v657
          %v666 = vpack.c.b16 %v660, %v659
          %v667 = vpack.c.b16 %v662, %v661
          %v668 = vpack.c.b16 %v664, %v663
          %vm673 = vcmask 523264
          %v675 = vsel %vm673, %v647, 0
          %v678 = vsel %vm673, %v648, 0
          %680 = vmatprep.subr.bf16.mxu0 0
          %681 = vmatpush1.bf16.msra.mxu0 %v665
          %682 = vmatprep.subr.bf16.mxu0 0
          %683 = vmatpush1.bf16.msra.mxu0 %v666
          %684 = vmatprep.subr.bf16.mxu0 0
          %685 = vmatpush1.bf16.msra.mxu0 %v667
          %686 = vmatprep.subr.bf16.mxu0 0
          %687 = vmatpush1.bf16.msra.mxu0 %v668
          %688 = vmatprep.subr.bf16.mxu0 0
          %689 = vmatpush1.bf16.msra.mxu0 0
          %690 = vmatprep.subr.bf16.mxu0 0
          %691 = vmatpush1.bf16.msra.mxu0 0
          %692 = vmatprep.subr.bf16.mxu0 0
          %693 = vmatpush1.bf16.msra.mxu0 0
          %694 = vmatprep.subr.bf16.mxu0 0
          %695 = vmatpush1.bf16.msra.mxu0 0
          %696 = vmatprep.subr.bf16.mxu0 0
          %697 = vmatpush1.bf16.msra.mxu0 0
          %698 = vmatprep.subr.bf16.mxu0 0
          %699 = vmatpush1.bf16.msra.mxu0 0
          %700 = vmatprep.subr.bf16.mxu0 0
          %701 = vmatpush1.bf16.msra.mxu0 0
          %702 = vmatprep.subr.bf16.mxu0 0
          %703 = vmatpush1.bf16.msra.mxu0 0
          %704 = vmatprep.subr.bf16.mxu0 0
          %705 = vmatpush1.bf16.msra.mxu0 0
          %706 = vmatprep.subr.bf16.mxu0 0
          %707 = vmatpush1.bf16.msra.mxu0 0
          %708 = vmatprep.subr.bf16.mxu0 0
          %709 = vmatpush1.bf16.msra.mxu0 0
          %710 = vmatprep.subr.bf16.mxu0 0
          %711 = vmatpush1.bf16.msra.mxu0 0
          %712 = vmatprep.mubr.bf16.mxu0 0
          %713 = vmatmul.mubr.bf16.gmra.mrb[0].mxu0 %v675
          %v714 = vpop.f32.mrb[0].mxu0
          %v715 = vadd.f32 0.0, %v714
          %v716 = vpop.f32.mrb[0].mxu0
          %v717 = vpop.f32.mrb[0].mxu0
          %v718 = vadd.f32 0.0, %v717
          %v719 = vpop.f32.mrb[0].mxu0
          %720 = vmatprep.mubr.bf16.mxu0 0
          %721 = vmatmul.mubr.bf16.gmra.mrb[0].mxu0 %v678
          %v722 = vpop.f32.mrb[0].mxu0
          %v723 = vadd.f32 0.0, %v722
          %v724 = vpop.f32.mrb[0].mxu0
          %v725 = vpop.f32.mrb[0].mxu0
          %v726 = vadd.f32 0.0, %v725
          %v727 = vpop.f32.mrb[0].mxu0
          %728 = vdwg.mxu0
          %v729 = vadd.f32 %v623, %v715
          %v730 = vadd.f32 %v624, %v718
          %v731 = vadd.f32 %v625, %v723
          %v732 = vadd.f32 %v626, %v726
          %vm733 = vcmask 130048
          %734 = vst.msk [vmem:[#allocation2] sm:$0xff] %vm733, %v729
          %735 = vst.msk [vmem:[#allocation2 + $0x8] sm:$0xff] %vm733, %v730
          %736 = vst.msk [vmem:[#allocation2 + $0x10] sm:$0xff] %vm733, %v731
          %737 = vst.msk [vmem:[#allocation2 + $0x18] sm:$0xff] %vm733, %v732
        $region72: #{tpu_custom_call.1} parent=63 // pred_fallthru
          _
        // Predicated region
        $region73: #{tpu_custom_call.1} parent=63 // pred_check
          %p738 = pneg %p602
        $region74: #{tpu_custom_call.1} parent=63 // pred_check_branch
          %740 = sbr.rel (%p738) target = $region76
        $region75: #{tpu_custom_call.1} parent=63 // pred_region
          %v741 = vld [vmem:[#allocation2] sm:$0xff]
          %v742 = vld [vmem:[#allocation2 + $0x8] sm:$0xff]
          %v743 = vld [vmem:[#allocation2 + $0x10] sm:$0xff]
          %v744 = vld [vmem:[#allocation2 + $0x18] sm:$0xff]
          %v745 = vld [vmem:[%s598] sm:$0xff]
          %v746 = vld [vmem:[%s598 + $0x8] sm:$0xff]
          %v747 = vld [vmem:[%s598 + $0x10] sm:$0xff]
          %v748 = vld [vmem:[%s598 + $0x18] sm:$0xff]
          %750 = vset.pattern.permute.xlu0 0
          %751 = vperm.xlu0 %750, %v745
          %v752 = vpop.permute.xlu0 %751
          %755 = vset.pattern.permute.xlu0 0
          %756 = vperm.xlu0 %755, %v746
          %v757 = vpop.permute.xlu0 %756
          %760 = vset.pattern.permute.xlu0 0
          %761 = vperm.xlu0 %760, %v747
          %v762 = vpop.permute.xlu0 %761
          %765 = vset.pattern.permute.xlu0 0
          %766 = vperm.xlu0 %765, %v748
          %v767 = vpop.permute.xlu0 %766
          %v769 = vmul.f32 %v741, %v752
          %v770 = vmul.f32 %v742, %v757
          %v771 = vmul.f32 %v743, %v762
          %v772 = vmul.f32 %v744, %v767
          %v773 = vld [vmem:[%s6] sm:$0xff]
          %v774 = vld [vmem:[%s6 + $0x8] sm:$0xff]
          %v775 = vld [vmem:[%s592] sm:$0xf]
          %v776 = vld [vmem:[%s592 + $0x4] sm:$0xf]
          %v777 = vld [vmem:[%s592 + $0x8] sm:$0xf]
          %v778 = vld [vmem:[%s592 + $0xc] sm:$0xf]
          %v779 = vld [vmem:[%s8] sm:$0xf]
          %v780 = vld [vmem:[%s8 + $0x4] sm:$0xf]
          %v785 = vunpack.c.l.b16 %v775
          %v786 = vunpack.c.l.b16 %v776
          %v787 = vunpack.c.l.b16 %v777
          %v788 = vunpack.c.l.b16 %v778
          %v789 = vpack.c.b16 %v786, %v785
          %v790 = vpack.c.b16 %v788, %v787
          %v793 = vunpack.c.l.b16 %v779
          %v794 = vunpack.c.l.b16 %v780
          %v795 = vpack.c.b16 %v794, %v793
          %vm797 = vcmask 130048
          %v799 = vsel %vm797, %v789, 0
          %v802 = vsel %vm797, %v790, 0
          %804 = vmatprep.subr.bf16.mxu0 0
          %805 = vmatpush1.bf16.msra.mxu0 %v795
          %806 = vmatprep.subr.bf16.mxu0 0
          %807 = vmatpush1.bf16.msra.mxu0 0
          %808 = vmatprep.subr.bf16.mxu0 0
          %809 = vmatpush1.bf16.msra.mxu0 0
          %810 = vmatprep.subr.bf16.mxu0 0
          %811 = vmatpush1.bf16.msra.mxu0 0
          %812 = vmatprep.subr.bf16.mxu0 0
          %813 = vmatpush1.bf16.msra.mxu0 0
          %814 = vmatprep.subr.bf16.mxu0 0
          %815 = vmatpush1.bf16.msra.mxu0 0
          %816 = vmatprep.subr.bf16.mxu0 0
          %817 = vmatpush1.bf16.msra.mxu0 0
          %818 = vmatprep.subr.bf16.mxu0 0
          %819 = vmatpush1.bf16.msra.mxu0 0
          %820 = vmatprep.subr.bf16.mxu0 0
          %821 = vmatpush1.bf16.msra.mxu0 0
          %822 = vmatprep.subr.bf16.mxu0 0
          %823 = vmatpush1.bf16.msra.mxu0 0
          %824 = vmatprep.subr.bf16.mxu0 0
          %825 = vmatpush1.bf16.msra.mxu0 0
          %826 = vmatprep.subr.bf16.mxu0 0
          %827 = vmatpush1.bf16.msra.mxu0 0
          %828 = vmatprep.subr.bf16.mxu0 0
          %829 = vmatpush1.bf16.msra.mxu0 0
          %830 = vmatprep.subr.bf16.mxu0 0
          %831 = vmatpush1.bf16.msra.mxu0 0
          %832 = vmatprep.subr.bf16.mxu0 0
          %833 = vmatpush1.bf16.msra.mxu0 0
          %834 = vmatprep.subr.bf16.mxu0 0
          %835 = vmatpush1.bf16.msra.mxu0 0
          %836 = vmatprep.mubr.bf16.mxu0 0
          %837 = vmatmul.mubr.bf16.gmra.mrb[0].mxu0 %v799
          %v838 = vpop.f32.mrb[0].mxu0
          %v839 = vadd.f32 0.0, %v838
          %v840 = vpop.f32.mrb[0].mxu0
          %v841 = vpop.f32.mrb[0].mxu0
          %v842 = vadd.f32 0.0, %v841
          %v843 = vpop.f32.mrb[0].mxu0
          %844 = vmatprep.mubr.bf16.mxu0 0
          %845 = vmatmul.mubr.bf16.gmra.mrb[0].mxu0 %v802
          %v846 = vpop.f32.mrb[0].mxu0
          %v847 = vadd.f32 0.0, %v846
          %v848 = vpop.f32.mrb[0].mxu0
          %v849 = vpop.f32.mrb[0].mxu0
          %v850 = vadd.f32 0.0, %v849
          %v851 = vpop.f32.mrb[0].mxu0
          %852 = vdwg.mxu0
          %v854 = vsel %vm797, %v769, 0
          %v857 = vsel %vm797, %v770, 0
          %v860 = vsel %vm797, %v771, 0
          %v863 = vsel %vm797, %v772, 0
          %865 = vmatprep.subr.mxu0 0.0
          %866 = vmatpush1.msra.mxu0 %v773
          %867 = vmatprep.subr.mxu0 0.0
          %868 = vmatpush1.msra.mxu0 %v774
          %869 = vmatprep.subr.mxu0 0.0
          %870 = vmatpush1.msra.mxu0 0.0
          %871 = vmatprep.subr.mxu0 0.0
          %872 = vmatpush1.msra.mxu0 0.0
          %873 = vmatprep.subr.mxu0 0.0
          %874 = vmatpush1.msra.mxu0 0.0
          %875 = vmatprep.subr.mxu0 0.0
          %876 = vmatpush1.msra.mxu0 0.0
          %877 = vmatprep.subr.mxu0 0.0
          %878 = vmatpush1.msra.mxu0 0.0
          %879 = vmatprep.subr.mxu0 0.0
          %880 = vmatpush1.msra.mxu0 0.0
          %881 = vmatprep.subr.mxu0 0.0
          %882 = vmatpush1.msra.mxu0 0.0
          %883 = vmatprep.subr.mxu0 0.0
          %884 = vmatpush1.msra.mxu0 0.0
          %885 = vmatprep.subr.mxu0 0.0
          %886 = vmatpush1.msra.mxu0 0.0
          %887 = vmatprep.subr.mxu0 0.0
          %888 = vmatpush1.msra.mxu0 0.0
          %889 = vmatprep.subr.mxu0 0.0
          %890 = vmatpush1.msra.mxu0 0.0
          %891 = vmatprep.subr.mxu0 0.0
          %892 = vmatpush1.msra.mxu0 0.0
          %893 = vmatprep.subr.mxu0 0.0
          %894 = vmatpush1.msra.mxu0 0.0
          %895 = vmatprep.subr.mxu0 0.0
          %896 = vmatpush1.msra.mxu0 0.0
          %897 = vmatprep.subr.mxu0 0.0
          %898 = vmatpush1.msra.mxu0 0.0
          %899 = vmatprep.subr.mxu0 0.0
          %900 = vmatpush1.msra.mxu0 0.0
          %901 = vmatprep.subr.mxu0 0.0
          %902 = vmatpush1.msra.mxu0 0.0
          %903 = vmatprep.subr.mxu0 0.0
          %904 = vmatpush1.msra.mxu0 0.0
          %905 = vmatprep.subr.mxu0 0.0
          %906 = vmatpush1.msra.mxu0 0.0
          %907 = vmatprep.subr.mxu0 0.0
          %908 = vmatpush1.msra.mxu0 0.0
          %909 = vmatprep.subr.mxu0 0.0
          %910 = vmatpush1.msra.mxu0 0.0
          %911 = vmatprep.subr.mxu0 0.0
          %912 = vmatpush1.msra.mxu0 0.0
          %913 = vmatprep.subr.mxu0 0.0
          %914 = vmatpush1.msra.mxu0 0.0
          %915 = vmatprep.subr.mxu0 0.0
          %916 = vmatpush1.msra.mxu0 0.0
          %917 = vmatprep.subr.mxu0 0.0
          %918 = vmatpush1.msra.mxu0 0.0
          %919 = vmatprep.subr.mxu0 0.0
          %920 = vmatpush1.msra.mxu0 0.0
          %921 = vmatprep.subr.mxu0 0.0
          %922 = vmatpush1.msra.mxu0 0.0
          %923 = vmatprep.subr.mxu0 0.0
          %924 = vmatpush1.msra.mxu0 0.0
          %925 = vmatprep.subr.mxu0 0.0
          %926 = vmatpush1.msra.mxu0 0.0
          %927 = vmatprep.subr.mxu0 0.0
          %928 = vmatpush1.msra.mxu0 0.0
          %929 = vmatprep.mubr.f32.mxu0 0.0
          %930 = vmatmul.mubr.f32.gmra.mrb[0].mxu0 %v854
          %v931 = vpop.f32.mrb[0].mxu0
          %v932 = vadd.f32 %v839, %v931
          %v933 = vpop.f32.mrb[0].mxu0
          %934 = vmatprep.mubr.f32.mxu0 0.0
          %935 = vmatmul.mubr.f32.gmra.mrb[0].mxu0 %v857
          %v936 = vpop.f32.mrb[0].mxu0
          %v937 = vadd.f32 %v842, %v936
          %v938 = vpop.f32.mrb[0].mxu0
          %939 = vmatprep.mubr.f32.mxu0 0.0
          %940 = vmatmul.mubr.f32.gmra.mrb[0].mxu0 %v860
          %v941 = vpop.f32.mrb[0].mxu0
          %v942 = vadd.f32 %v847, %v941
          %v943 = vpop.f32.mrb[0].mxu0
          %944 = vmatprep.mubr.f32.mxu0 0.0
          %945 = vmatmul.mubr.f32.gmra.mrb[0].mxu0 %v863
          %v946 = vpop.f32.mrb[0].mxu0
          %v947 = vadd.f32 %v850, %v946
          %v948 = vpop.f32.mrb[0].mxu0
          %949 = vdwg.mxu0
          %v950 = vld [vmem:[%s7] sm:$0x1]
          %v952 = vlaneseq
          %v953 = vshrl.u32 %v952, 7
          %v954 = vsub.s32 0, %v953
          %v955 = vrot.slane %v950, %v954
          %v957 = vadd.f32 %v932, %v955
          %v958 = vadd.f32 %v937, %v955
          %v959 = vadd.f32 %v942, %v955
          %v960 = vadd.f32 %v947, %v955
          %v961 = vmax.f32 %v957, 0.0
          %v962 = vmax.f32 %v958, 0.0
          %v963 = vmax.f32 %v959, 0.0
          %v964 = vmax.f32 %v960, 0.0
          %v965 = vpack.c.bf16 %v962, %v961
          %v966 = vpack.c.bf16 %v964, %v963
          %v967 = vld [vmem:[%s9] sm:$0xf]
          %v968 = vld [vmem:[%s9 + $0x4] sm:$0xf]
          %v969 = vld [vmem:[%s9 + $0x8] sm:$0xf]
          %v970 = vld [vmem:[%s9 + $0xc] sm:$0xf]
          %v971 = vld [vmem:[%s10] sm:$0x1]
          %v973 = vlaneseq
          %v974 = vshrl.u32 %v973, 7
          %v975 = vsub.s32 0, %v974
          %v976 = vrot.slane %v971, %v975
          %v982 = vunpack.c.l.b16 %v967
          %v983 = vunpack.c.l.b16 %v968
          %v984 = vunpack.c.l.b16 %v969
          %v985 = vunpack.c.l.b16 %v970
          %v986 = vpack.c.b16 %v983, %v982
          %v987 = vpack.c.b16 %v985, %v984
          %vm990 = vcmask 261120
          %v992 = vsel %vm990, %v965, 0
          %v995 = vsel %vm990, %v966, 0
          %997 = vmatprep.subr.bf16.mxu0 0
          %998 = vmatpush1.bf16.msra.mxu0 %v986
          %999 = vmatprep.subr.bf16.mxu0 0
          %1000 = vmatpush1.bf16.msra.mxu0 %v987
          %1001 = vmatprep.subr.bf16.mxu0 0
          %1002 = vmatpush1.bf16.msra.mxu0 0
          %1003 = vmatprep.subr.bf16.mxu0 0
          %1004 = vmatpush1.bf16.msra.mxu0 0
          %1005 = vmatprep.subr.bf16.mxu0 0
          %1006 = vmatpush1.bf16.msra.mxu0 0
          %1007 = vmatprep.subr.bf16.mxu0 0
          %1008 = vmatpush1.bf16.msra.mxu0 0
          %1009 = vmatprep.subr.bf16.mxu0 0
          %1010 = vmatpush1.bf16.msra.mxu0 0
          %1011 = vmatprep.subr.bf16.mxu0 0
          %1012 = vmatpush1.bf16.msra.mxu0 0
          %1013 = vmatprep.subr.bf16.mxu0 0
          %1014 = vmatpush1.bf16.msra.mxu0 0
          %1015 = vmatprep.subr.bf16.mxu0 0
          %1016 = vmatpush1.bf16.msra.mxu0 0
          %1017 = vmatprep.subr.bf16.mxu0 0
          %1018 = vmatpush1.bf16.msra.mxu0 0
          %1019 = vmatprep.subr.bf16.mxu0 0
          %1020 = vmatpush1.bf16.msra.mxu0 0
          %1021 = vmatprep.subr.bf16.mxu0 0
          %1022 = vmatpush1.bf16.msra.mxu0 0
          %1023 = vmatprep.subr.bf16.mxu0 0
          %1024 = vmatpush1.bf16.msra.mxu0 0
          %1025 = vmatprep.subr.bf16.mxu0 0
          %1026 = vmatpush1.bf16.msra.mxu0 0
          %1027 = vmatprep.subr.bf16.mxu0 0
          %1028 = vmatpush1.bf16.msra.mxu0 0
          %1029 = vmatprep.mubr.bf16.mxu0 0
          %1030 = vmatmul.mubr.bf16.gmra.mrb[0].mxu0 %v992
          %v1031 = vpop.f32.mrb[0].mxu0
          %v1032 = vadd.f32 %v976, %v1031
          %v1033 = vpop.f32.mrb[0].mxu0
          %v1034 = vpop.f32.mrb[0].mxu0
          %v1035 = vadd.f32 %v976, %v1034
          %v1036 = vpop.f32.mrb[0].mxu0
          %1037 = vmatprep.mubr.bf16.mxu0 0
          %1038 = vmatmul.mubr.bf16.gmra.mrb[0].mxu0 %v995
          %v1039 = vpop.f32.mrb[0].mxu0
          %v1040 = vadd.f32 %v976, %v1039
          %v1041 = vpop.f32.mrb[0].mxu0
          %v1042 = vpop.f32.mrb[0].mxu0
          %v1043 = vadd.f32 %v976, %v1042
          %v1044 = vpop.f32.mrb[0].mxu0
          %1045 = vdwg.mxu0
          %v1046 = vmax.f32 %v1032, 0.0
          %v1047 = vmax.f32 %v1035, 0.0
          %v1048 = vmax.f32 %v1040, 0.0
          %v1049 = vmax.f32 %v1043, 0.0
          %v1050 = vpack.c.bf16 %v1047, %v1046
          %v1051 = vpack.c.bf16 %v1049, %v1048
          %v1052 = vld [vmem:[%s11] sm:$0xf]
          %v1053 = vld [vmem:[%s11 + $0x4] sm:$0xf]
          %v1054 = vld [vmem:[%s11 + $0x8] sm:$0xf]
          %v1055 = vld [vmem:[%s11 + $0xc] sm:$0xf]
          %v1056 = vld [vmem:[%s12] sm:$0x1]
          %v1058 = vlaneseq
          %v1059 = vshrl.u32 %v1058, 7
          %v1060 = vsub.s32 0, %v1059
          %v1061 = vrot.slane %v1056, %v1060
          %v1067 = vunpack.c.l.b16 %v1052
          %v1068 = vunpack.c.l.b16 %v1053
          %v1069 = vunpack.c.l.b16 %v1054
          %v1070 = vunpack.c.l.b16 %v1055
          %v1071 = vpack.c.b16 %v1068, %v1067
          %v1072 = vpack.c.b16 %v1070, %v1069
          %v1076 = vsel %vm990, %v1050, 0
          %v1079 = vsel %vm990, %v1051, 0
          %1081 = vmatprep.subr.bf16.mxu0 0
          %1082 = vmatpush1.bf16.msra.mxu0 %v1071
          %1083 = vmatprep.subr.bf16.mxu0 0
          %1084 = vmatpush1.bf16.msra.mxu0 %v1072
          %1085 = vmatprep.subr.bf16.mxu0 0
          %1086 = vmatpush1.bf16.msra.mxu0 0
          %1087 = vmatprep.subr.bf16.mxu0 0
          %1088 = vmatpush1.bf16.msra.mxu0 0
          %1089 = vmatprep.subr.bf16.mxu0 0
          %1090 = vmatpush1.bf16.msra.mxu0 0
          %1091 = vmatprep.subr.bf16.mxu0 0
          %1092 = vmatpush1.bf16.msra.mxu0 0
          %1093 = vmatprep.subr.bf16.mxu0 0
          %1094 = vmatpush1.bf16.msra.mxu0 0
          %1095 = vmatprep.subr.bf16.mxu0 0
          %1096 = vmatpush1.bf16.msra.mxu0 0
          %1097 = vmatprep.subr.bf16.mxu0 0
          %1098 = vmatpush1.bf16.msra.mxu0 0
          %1099 = vmatprep.subr.bf16.mxu0 0
          %1100 = vmatpush1.bf16.msra.mxu0 0
          %1101 = vmatprep.subr.bf16.mxu0 0
          %1102 = vmatpush1.bf16.msra.mxu0 0
          %1103 = vmatprep.subr.bf16.mxu0 0
          %1104 = vmatpush1.bf16.msra.mxu0 0
          %1105 = vmatprep.subr.bf16.mxu0 0
          %1106 = vmatpush1.bf16.msra.mxu0 0
          %1107 = vmatprep.subr.bf16.mxu0 0
          %1108 = vmatpush1.bf16.msra.mxu0 0
          %1109 = vmatprep.subr.bf16.mxu0 0
          %1110 = vmatpush1.bf16.msra.mxu0 0
          %1111 = vmatprep.subr.bf16.mxu0 0
          %1112 = vmatpush1.bf16.msra.mxu0 0
          %1113 = vmatprep.mubr.bf16.mxu0 0
          %1114 = vmatmul.mubr.bf16.gmra.mrb[0].mxu0 %v1076
          %v1115 = vpop.f32.mrb[0].mxu0
          %v1116 = vadd.f32 %v1061, %v1115
          %v1117 = vpop.f32.mrb[0].mxu0
          %v1118 = vpop.f32.mrb[0].mxu0
          %v1119 = vadd.f32 %v1061, %v1118
          %v1120 = vpop.f32.mrb[0].mxu0
          %1121 = vmatprep.mubr.bf16.mxu0 0
          %1122 = vmatmul.mubr.bf16.gmra.mrb[0].mxu0 %v1079
          %v1123 = vpop.f32.mrb[0].mxu0
          %v1124 = vadd.f32 %v1061, %v1123
          %v1125 = vpop.f32.mrb[0].mxu0
          %v1126 = vpop.f32.mrb[0].mxu0
          %v1127 = vadd.f32 %v1061, %v1126
          %v1128 = vpop.f32.mrb[0].mxu0
          %1129 = vdwg.mxu0
          %v1130 = vpack.c.bf16 %v1119, %v1116
          %v1131 = vpack.c.bf16 %v1127, %v1124
          %v1134 = vunpack.c.l.b16 %v1130
          %v1135 = vunpack.c.h.b16 %v1130
          %v1136 = vunpack.c.l.b16 %v1131
          %v1137 = vunpack.c.h.b16 %v1131
          %v1138 = vpack.c.b16 %v1134, %v1134
          %v1139 = vpack.c.b16 %v1135, %v1135
          %v1140 = vpack.c.b16 %v1136, %v1136
          %v1141 = vpack.c.b16 %v1137, %v1137
          %1146 = vst [vmem:[%s540] sm:$0xf] %v1138
          %1147 = vst [vmem:[%s540 + $0x4] sm:$0xf] %v1139
          %1148 = vst [vmem:[%s540 + $0x8] sm:$0xf] %v1140
          %1149 = vst [vmem:[%s540 + $0xc] sm:$0xf] %v1141
        $region76: #{tpu_custom_call.1} parent=63 // pred_fallthru
          _
        %s1150 = sand.u32 %s342, 1
        %s1151 = scalar_lea.sflag [#allocation7], %s1150
        %s1152 = sand.u32 %s342, 1
        %s1153 = smul.addr %s1152, 16
        %s1154 = scalar_lea.vmem [#allocation6], %s1153
        // Predicated region
        $region77: #{tpu_custom_call.1} parent=63 // pred_check
          %p1155 = pneg %p352
        $region78: #{tpu_custom_call.1} parent=63 // pred_check_branch
          %1157 = sbr.rel (%p1155) target = $region80
        $region79: #{tpu_custom_call.1} parent=63 // pred_region
          %s1158 = smul.u32 4, %s41
          %s1160 = ssub.s32 256, 256
          %1161 = vsyncadd %s1151, %s1160
          %s1162 = smul.addr %s1158, 64
          %s1163 = scalar_lea.hbm %s13, %s1162
          %s1164 = sshll.u32 %s1154, 4
          %s1165 = int_to_ptr.vmem [resolvable:$true] %s1164
          %1170 = dma.vmem_to_hbm [thread:$0]  %s1165, 256, %s1163, %s1151, 64, 64, 4
        $region80: #{tpu_custom_call.1} parent=63 // pred_fallthru
          _
      $region64: #{tpu_custom_call.1} parent=5 // pred_fallthru
        _
      %p1171 = scmp.le.s32.totalorder 2, %s32
      // Predicated region
      $region81: #{tpu_custom_call.1} parent=5 // pred_check
        %p1172 = pneg %p1171
      $region82: #{tpu_custom_call.1} parent=5 // pred_check_branch
        %1174 = sbr.rel (%p1172) target = $region84
      $region83: #{tpu_custom_call.1} parent=5 // pred_region
        %s1175 = ssub.s32 %s32, 2
        // Predicated region
        $region85: #{tpu_custom_call.1} parent=83 // pred_check
          %p1176 = pneg %p358
        $region86: #{tpu_custom_call.1} parent=83 // pred_check_branch
          %1178 = sbr.rel (%p1176) target = $region88
        $region87: #{tpu_custom_call.1} parent=83 // pred_region
          %s1179 = sand.u32 %s343, 1
          %s1180 = scalar_lea.sflag [#allocation7], %s1179
          %s1181 = sand.u32 %s343, 1
          %s1182 = smul.addr %s1181, 16
          %s1183 = scalar_lea.vmem [#allocation6], %s1182
          %1184 = dma.done %s1180, 256
        $region88: #{tpu_custom_call.1} parent=83 // pred_fallthru
          _
      $region84: #{tpu_custom_call.1} parent=5 // pred_fallthru
        _
    $region6: #{tpu_custom_call.1} parent=1 // loop_footer
      %s36 = sadd.s32 1, %s32
    $region7: #{tpu_custom_call.1} parent=1 // loop_footer_branch
      %31 = sbr.rel target = $region3
    $region8: #{tpu_custom_call.1} parent=1 // loop_exit
      _
    %1185 = vsyncpa [#allocation7], 1
    %s1186 = scalar_lea.sflag [#allocation7], 1
    %1187 = vsyncpa %s1186, 1

</llo_original>
